<compile_context>
chip_gen: v7x
topology: tpu7x:2x2x1
jax: 0.10.0
libtpu: 0.0.40
codegen_flags: <defaults>
</compile_context>

<pallas_src>
import functools
import math

import jax
import jax.numpy as jnp
import numpy as np
from jax.experimental import pallas as pl
from jax.experimental.pallas import tpu as pltpu


def _crfiqa_kernel(emb_ref, w_ref, inv_en_ref, inv_wn_ref, label_ref,
                   cos_ref, dist_ref, maxneg_ref,
                   dist_acc, maxneg_acc, *, s, m, tc):
    j = pl.program_id(1)

    @pl.when(j == 0)
    def _init():
        dist_acc[...] = jnp.zeros(dist_acc.shape, jnp.float32)
        maxneg_acc[...] = jnp.full(maxneg_acc.shape, -jnp.inf, jnp.float32)

    # Normalize with the precomputed inverse norms; bf16 into the MXU, f32 acc.
    emb_n = (emb_ref[...].astype(jnp.float32) * inv_en_ref[...]).astype(jnp.bfloat16)
    w_n = (w_ref[...].astype(jnp.float32) * inv_wn_ref[...]).astype(jnp.bfloat16)

    cos_theta = jnp.dot(emb_n, w_n, preferred_element_type=jnp.float32)   # (tb, tc)
    cos_theta = jnp.clip(cos_theta, -1.0, 1.0)

    label = label_ref[...]                                   # (tb, 1) int32
    valid = label != jnp.int32(-1)
    col = jax.lax.broadcasted_iota(jnp.int32, cos_theta.shape, 1) + j * tc
    onehot = (col == label) & valid                          # (tb, tc)

    # distmat: the target cosine appears in exactly one class tile per valid row.
    tgt = jnp.sum(jnp.where(onehot, cos_theta, 0.0), axis=1, keepdims=True)  # (tb,1)
    dist_acc[...] += tgt

    # max_negative: running max with the target entry replaced by -1e-12.
    tile_max = jnp.max(jnp.where(onehot, jnp.float32(-1e-12), cos_theta),
                       axis=1, keepdims=True)
    maxneg_acc[...] = jnp.maximum(maxneg_acc[...], tile_max)

    # Margin only on the gathered target value: cos(acos(t)+m) exact identity.
    sin_t = jnp.sqrt(jnp.maximum(1.0 - tgt * tgt, 0.0))
    with_margin = tgt * jnp.float32(math.cos(m)) - sin_t * jnp.float32(math.sin(m))
    cos_ref[...] = (jnp.where(onehot, with_margin, cos_theta)
                    * jnp.float32(s)).astype(cos_ref.dtype)

    @pl.when(j == pl.num_programs(1) - 1)
    def _finish():
        dist_ref[...] = dist_acc[...]
        maxneg_ref[...] = maxneg_acc[...]


def _auto_tile(n, candidates):
    for t in candidates:
        if t <= n and n % t == 0:
            return t
    return n


def crfiqa_metric(embeddings, label, weight, s=64.0, m=0.5,
                  block_b=None, block_c=None):
    """Pallas implementation of CrFiqaMetric.forward.

    Returns (scaled_logits (B, C), 0, distmat (B, 1), max_negative (B, 1)).
    # TODO(synk): rows with label == -1 are masked (no margin; distmat = 0) and
    # kept in the (B,1) outputs rather than dropped via a dynamic row gather;
    # this matches PyTorch exactly in the all-valid-label (training) case.
    """
    B, D = embeddings.shape
    D2, C = weight.shape
    assert D == D2
    label2d = jnp.reshape(label, (B, 1)).astype(jnp.int32)

    tb = block_b if block_b is not None else _auto_tile(B, (256, 128, 64, 32, 16, 8))
    tc = block_c if block_c is not None else _auto_tile(C, (4096, 2048, 1024, 512, 256, 128))
    assert B % tb == 0 and C % tc == 0, "tile sizes must divide (B, C)"

    # Hoisted one-pass inverse norms: (B,1) embedding rows, (1,C) weight columns.
    inv_en = jax.lax.rsqrt(
        jnp.sum(jnp.square(embeddings.astype(jnp.float32)), axis=1, keepdims=True))
    inv_wn = jax.lax.rsqrt(
        jnp.sum(jnp.square(weight.astype(jnp.float32)), axis=0, keepdims=True))

    out_dtype = embeddings.dtype  # stream caller's dtype; no forced f32 copies in HBM

    # Double-buffered per-step VMEM estimate with headroom; cap so it also fits
    # v7x's 64 MiB per-core VMEM (32 MiB scoped default).
    isz = lambda dt: jnp.dtype(dt).itemsize
    est = 2 * (tb * D * isz(embeddings.dtype)
               + D * tc * isz(weight.dtype)
               + tb * tc * isz(out_dtype)
               + (5 * tb + tc) * 4)
    vmem_limit = int(min(max(3 * est, 8 * 1024 * 1024), 32 * 1024 * 1024))

    kernel = functools.partial(_crfiqa_kernel, s=float(s), m=float(m), tc=tc)
    grid = (B // tb, C // tc)

    cos_theta, distmat, max_negative = pl.pallas_call(
        kernel,
        out_shape=(
            jax.ShapeDtypeStruct((B, C), out_dtype),
            jax.ShapeDtypeStruct((B, 1), jnp.float32),
            jax.ShapeDtypeStruct((B, 1), jnp.float32),
        ),
        grid_spec=pltpu.PrefetchScalarGridSpec(
            num_scalar_prefetch=0,
            grid=grid,
            in_specs=[
                pl.BlockSpec((tb, D), lambda i, j: (i, 0)),   # embeddings
                pl.BlockSpec((D, tc), lambda i, j: (0, j)),   # weight
                pl.BlockSpec((tb, 1), lambda i, j: (i, 0)),   # inv row norms
                pl.BlockSpec((1, tc), lambda i, j: (0, j)),   # inv col norms
                pl.BlockSpec((tb, 1), lambda i, j: (i, 0)),   # labels
            ],
            out_specs=(
                pl.BlockSpec((tb, tc), lambda i, j: (i, j)),  # scaled logits
                pl.BlockSpec((tb, 1), lambda i, j: (i, 0)),   # distmat (resident over j)
                pl.BlockSpec((tb, 1), lambda i, j: (i, 0)),   # max_negative (resident)
            ),
            scratch_shapes=[
                pltpu.VMEM((tb, 1), jnp.float32),             # distmat accumulator
                pltpu.VMEM((tb, 1), jnp.float32),             # max_negative accumulator
            ],
        ),
        compiler_params=pltpu.CompilerParams(
            dimension_semantics=("parallel", "arbitrary"),
            vmem_limit_bytes=vmem_limit,
        ),
    )(embeddings, weight, inv_en, inv_wn, label2d)
    return cos_theta, 0, distmat, max_negative


def _reference_forward(emb, label, weight, s, m):
    """Pure-jnp reference matching the PyTorch module (all-valid-label case)."""
    emb_n = emb / jnp.linalg.norm(emb, axis=1, keepdims=True)
    w_n = weight / jnp.linalg.norm(weight, axis=0, keepdims=True)
    cos = jnp.clip(emb_n @ w_n, -1.0, 1.0)
    B, C = cos.shape
    onehot = (jnp.arange(C)[None, :] == label[:, None]) & (label[:, None] != -1)
    dist = jnp.sum(jnp.where(onehot, cos, 0.0), axis=1, keepdims=True)
    maxneg = jnp.max(jnp.where(onehot, jnp.float32(-1e-12), cos), axis=1, keepdims=True)
    logits = jnp.where(onehot, jnp.cos(jnp.arccos(cos) + m), cos) * s
    return logits, dist, maxneg


if __name__ == "__main__":
    # Small shapes consistent with the module (in_features=32); C=256, B=16 with
    # forced 8x128 blocks so the multi-tile accumulator path is exercised.
    B, in_features, out_features = 16, 32, 256
    s_val, m_val = 64.0, 0.5

    key = jax.random.PRNGKey(0)
    k_emb, k_w, k_lbl = jax.random.split(key, 3)

    embeddings = jax.random.normal(k_emb, (B, in_features), dtype=jnp.float32)
    # nn.init.normal_(self.kernel, std=0.01), shape (in_features, out_features)
    weight = 0.01 * jax.random.normal(k_w, (in_features, out_features), dtype=jnp.float32)
    label = jax.random.randint(k_lbl, (B,), 0, out_features, dtype=jnp.int32)

    logits, zero, distmat, max_neg = crfiqa_metric(
        embeddings, label, weight, s=s_val, m=m_val, block_b=8, block_c=128)
    jax.block_until_ready((logits, distmat, max_neg))

    assert logits.shape == (B, out_features)
    assert distmat.shape == (B, 1)
    assert max_neg.shape == (B, 1)

    ref_logits, ref_dist, ref_maxneg = _reference_forward(
        embeddings, label, weight, s_val, m_val)
    # Loose tolerance on the scaled logits: the MXU path uses bf16 inputs.
    np.testing.assert_allclose(np.asarray(logits), np.asarray(ref_logits), atol=1.0)
    np.testing.assert_allclose(np.asarray(distmat), np.asarray(ref_dist), atol=0.02)
    np.testing.assert_allclose(np.asarray(max_neg), np.asarray(ref_maxneg), atol=0.02)

    print("KERNEL_OK")
</pallas_src>

<mosaic_0001>
module attributes {stable_mosaic.version = 11 : i64} {
  func.func @_crfiqa_kernel(%arg0: i32, %arg1: i32, %arg2: memref<8x32xf32, #tpu.memory_space<vmem>>, %arg3: memref<32x128xf32, #tpu.memory_space<vmem>>, %arg4: memref<8x1xf32, #tpu.memory_space<vmem>>, %arg5: memref<1x128xf32, #tpu.memory_space<vmem>>, %arg6: memref<8x1xi32, #tpu.memory_space<vmem>>, %arg7: memref<8x128xf32, #tpu.memory_space<vmem>>, %arg8: memref<8x1xf32, #tpu.memory_space<vmem>>, %arg9: memref<8x1xf32, #tpu.memory_space<vmem>>, %arg10: memref<8x1xf32, #tpu.memory_space<vmem>>, %arg11: memref<8x1xf32, #tpu.memory_space<vmem>>) attributes {dimension_semantics = [#tpu.dimension_semantics<parallel>, #tpu.dimension_semantics<arbitrary>], iteration_bounds = array<i64: 2, 2>, scalar_prefetch = 0 : i64, scratch_operands = 2 : i64, tpu.core_type = #tpu.core_type<tc>, window_params = [{transform_indices = @transform_0, window_bounds = array<i64: 8, 32>}, {transform_indices = @transform_1, window_bounds = array<i64: 32, 128>}, {transform_indices = @transform_2, window_bounds = array<i64: 8, 1>}, {transform_indices = @transform_3, window_bounds = array<i64: 1, 128>}, {transform_indices = @transform_4, window_bounds = array<i64: 8, 1>}, {transform_indices = @transform_5, window_bounds = array<i64: 8, 128>}, {transform_indices = @transform_6, window_bounds = array<i64: 8, 1>}, {transform_indices = @transform_7, window_bounds = array<i64: 8, 1>}]} {
    %c0_i32 = arith.constant 0 : i32
    %0 = arith.cmpi eq, %arg1, %c0_i32 : i32
    %1 = arith.extui %0 : i1 to i32
    %c0_i32_0 = arith.constant 0 : i32
    %2 = arith.cmpi ne, %1, %c0_i32_0 : i32
    scf.if %2 {
      %cst_32 = arith.constant 0.000000e+00 : f32
      %63 = vector.broadcast %cst_32 : f32 to vector<8x1xf32>
      %c0_33 = arith.constant 0 : index
      %c0_34 = arith.constant 0 : index
      %64 = vector.load %arg10[%c0_33, %c0_34] : memref<8x1xf32, #tpu.memory_space<vmem>>, vector<8x1xf32>
      tpu.vector_store %arg10[%c0_33, %c0_34], %63 {strides = array<i32>} : memref<8x1xf32, #tpu.memory_space<vmem>>, vector<8x1xf32>,
      %cst_35 = arith.constant 0xFF800000 : f32
      %65 = vector.broadcast %cst_35 : f32 to vector<8x1xf32>
      %c0_36 = arith.constant 0 : index
      %c0_37 = arith.constant 0 : index
      %66 = vector.load %arg11[%c0_36, %c0_37] : memref<8x1xf32, #tpu.memory_space<vmem>>, vector<8x1xf32>
      tpu.vector_store %arg11[%c0_36, %c0_37], %65 {strides = array<i32>} : memref<8x1xf32, #tpu.memory_space<vmem>>, vector<8x1xf32>,
    } else {
    }
    %c0 = arith.constant 0 : index
    %c0_1 = arith.constant 0 : index
    %3 = vector.load %arg2[%c0, %c0_1] : memref<8x32xf32, #tpu.memory_space<vmem>>, vector<8x32xf32>
    %c0_2 = arith.constant 0 : index
    %c0_3 = arith.constant 0 : index
    %4 = vector.load %arg4[%c0_2, %c0_3] : memref<8x1xf32, #tpu.memory_space<vmem>>, vector<8x1xf32>
    %5 = vector.broadcast %4 : vector<8x1xf32> to vector<8x32xf32>
    %6 = arith.mulf %3, %5 : vector<8x32xf32>
    %7 = arith.truncf %6 : vector<8x32xf32> to vector<8x32xbf16>
    %c0_4 = arith.constant 0 : index
    %c0_5 = arith.constant 0 : index
    %8 = vector.load %arg3[%c0_4, %c0_5] : memref<32x128xf32, #tpu.memory_space<vmem>>, vector<32x128xf32>
    %c0_6 = arith.constant 0 : index
    %c0_7 = arith.constant 0 : index
    %9 = vector.load %arg5[%c0_6, %c0_7] : memref<1x128xf32, #tpu.memory_space<vmem>>, vector<1x128xf32>
    %10 = vector.broadcast %9 : vector<1x128xf32> to vector<32x128xf32>
    %11 = arith.mulf %8, %10 : vector<32x128xf32>
    %12 = arith.truncf %11 : vector<32x128xf32> to vector<32x128xbf16>
    %cst = arith.constant dense<0.000000e+00> : vector<8x128xf32>
    %13 = tpu.matmul %7, %12, %cst {dimension_numbers = #tpu.dot_dimension_numbers<[1], [0], [0], [1], [0, 0, 1, 1], [], []>} : vector<8x32xbf16>, vector<32x128xbf16>, vector<8x128xf32> -> vector<8x128xf32>
    %cst_8 = arith.constant -1.000000e+00 : f32
    %cst_9 = arith.constant 1.000000e+00 : f32
    %14 = vector.broadcast %cst_8 : f32 to vector<8x128xf32>
    %15 = arith.maximumf %14, %13 : vector<8x128xf32>
    %16 = vector.broadcast %cst_9 : f32 to vector<8x128xf32>
    %17 = arith.minimumf %16, %15 : vector<8x128xf32>
    %c0_10 = arith.constant 0 : index
    %c0_11 = arith.constant 0 : index
    %18 = vector.load %arg6[%c0_10, %c0_11] : memref<8x1xi32, #tpu.memory_space<vmem>>, vector<8x1xi32>
    %c-1_i32 = arith.constant -1 : i32
    %19 = vector.broadcast %c-1_i32 : i32 to vector<8x1xi32>
    %20 = arith.cmpi ne, %18, %19 : vector<8x1xi32>
    %21 = tpu.iota {dimensions = array<i32: 1>} : vector<8x128xi32>
    %c128_i32 = arith.constant 128 : i32
    %22 = arith.muli %arg1, %c128_i32 : i32
    %23 = vector.broadcast %22 : i32 to vector<8x128xi32>
    %24 = arith.addi %21, %23 : vector<8x128xi32>
    %25 = vector.broadcast %18 : vector<8x1xi32> to vector<8x128xi32>
    %26 = arith.cmpi eq, %24, %25 : vector<8x128xi32>
    %27 = vector.broadcast %20 : vector<8x1xi1> to vector<8x128xi1>
    %28 = arith.andi %26, %27 : vector<8x128xi1>
    %cst_12 = arith.constant 0.000000e+00 : f32
    %29 = vector.broadcast %cst_12 : f32 to vector<8x128xf32>
    %30 = arith.select %28, %17, %29 : vector<8x128xi1>, vector<8x128xf32>
    %cst_13 = arith.constant dense<0.000000e+00> : vector<8xf32>
    %31 = vector.multi_reduction <add>, %30, %cst_13 [1] : vector<8x128xf32> to vector<8xf32>
    %32 = vector.shape_cast %31 : vector<8xf32> to vector<8x1xf32>
    %c0_14 = arith.constant 0 : index
    %c0_15 = arith.constant 0 : index
    %33 = vector.load %arg10[%c0_14, %c0_15] : memref<8x1xf32, #tpu.memory_space<vmem>>, vector<8x1xf32>
    %34 = arith.addf %33, %32 : vector<8x1xf32>
    %c0_16 = arith.constant 0 : index
    %c0_17 = arith.constant 0 : index
    %35 = vector.load %arg10[%c0_16, %c0_17] : memref<8x1xf32, #tpu.memory_space<vmem>>, vector<8x1xf32>
    tpu.vector_store %arg10[%c0_16, %c0_17], %34 {strides = array<i32>} : memref<8x1xf32, #tpu.memory_space<vmem>>, vector<8x1xf32>,
    %cst_18 = arith.constant -9.99999996E-13 : f32
    %36 = vector.broadcast %cst_18 : f32 to vector<8x128xf32>
    %37 = arith.select %28, %36, %17 : vector<8x128xi1>, vector<8x128xf32>
    %cst_19 = arith.constant dense<0xFF800000> : vector<8xf32>
    %38 = vector.multi_reduction <maximumf>, %37, %cst_19 [1] : vector<8x128xf32> to vector<8xf32>
    %39 = vector.shape_cast %38 : vector<8xf32> to vector<8x1xf32>
    %c0_20 = arith.constant 0 : index
    %c0_21 = arith.constant 0 : index
    %40 = vector.load %arg11[%c0_20, %c0_21] : memref<8x1xf32, #tpu.memory_space<vmem>>, vector<8x1xf32>
    %41 = arith.maximumf %40, %39 : vector<8x1xf32>
    %c0_22 = arith.constant 0 : index
    %c0_23 = arith.constant 0 : index
    %42 = vector.load %arg11[%c0_22, %c0_23] : memref<8x1xf32, #tpu.memory_space<vmem>>, vector<8x1xf32>
    tpu.vector_store %arg11[%c0_22, %c0_23], %41 {strides = array<i32>} : memref<8x1xf32, #tpu.memory_space<vmem>>, vector<8x1xf32>,
    %43 = arith.mulf %32, %32 : vector<8x1xf32>
    %cst_24 = arith.constant 1.000000e+00 : f32
    %44 = vector.broadcast %cst_24 : f32 to vector<8x1xf32>
    %45 = arith.subf %44, %43 : vector<8x1xf32>
    %cst_25 = arith.constant 0.000000e+00 : f32
    %46 = vector.broadcast %cst_25 : f32 to vector<8x1xf32>
    %47 = arith.maximumf %45, %46 : vector<8x1xf32>
    %48 = math.sqrt %47 : vector<8x1xf32>
    %cst_26 = arith.constant 0.87758255 : f32
    %49 = vector.broadcast %cst_26 : f32 to vector<8x1xf32>
    %50 = arith.mulf %32, %49 : vector<8x1xf32>
    %cst_27 = arith.constant 0.47942555 : f32
    %51 = vector.broadcast %cst_27 : f32 to vector<8x1xf32>
    %52 = arith.mulf %48, %51 : vector<8x1xf32>
    %53 = arith.subf %50, %52 : vector<8x1xf32>
    %54 = vector.shape_cast %53 : vector<8x1xf32> to vector<8x1xf32>
    %55 = vector.broadcast %54 : vector<8x1xf32> to vector<8x128xf32>
    %56 = arith.select %28, %55, %17 : vector<8x128xi1>, vector<8x128xf32>
    %cst_28 = arith.constant 6.400000e+01 : f32
    %57 = vector.broadcast %cst_28 : f32 to vector<8x128xf32>
    %58 = arith.mulf %56, %57 : vector<8x128xf32>
    %c0_29 = arith.constant 0 : index
    %c0_30 = arith.constant 0 : index
    %59 = vector.load %arg7[%c0_29, %c0_30] : memref<8x128xf32, #tpu.memory_space<vmem>>, vector<8x128xf32>
    tpu.vector_store %arg7[%c0_29, %c0_30], %58 {strides = array<i32>} : memref<8x128xf32, #tpu.memory_space<vmem>>, vector<8x128xf32>,
    %c1_i32 = arith.constant 1 : i32
    %60 = arith.cmpi eq, %arg1, %c1_i32 : i32
    %61 = arith.extui %60 : i1 to i32
    %c0_i32_31 = arith.constant 0 : i32
    %62 = arith.cmpi ne, %61, %c0_i32_31 : i32
    scf.if %62 {
      %c0_32 = arith.constant 0 : index
      %c0_33 = arith.constant 0 : index
      %63 = vector.load %arg10[%c0_32, %c0_33] : memref<8x1xf32, #tpu.memory_space<vmem>>, vector<8x1xf32>
      %c0_34 = arith.constant 0 : index
      %c0_35 = arith.constant 0 : index
      %64 = vector.load %arg8[%c0_34, %c0_35] : memref<8x1xf32, #tpu.memory_space<vmem>>, vector<8x1xf32>
      tpu.vector_store %arg8[%c0_34, %c0_35], %63 {strides = array<i32>} : memref<8x1xf32, #tpu.memory_space<vmem>>, vector<8x1xf32>,
      %c0_36 = arith.constant 0 : index
      %c0_37 = arith.constant 0 : index
      %65 = vector.load %arg11[%c0_36, %c0_37] : memref<8x1xf32, #tpu.memory_space<vmem>>, vector<8x1xf32>
      %c0_38 = arith.constant 0 : index
      %c0_39 = arith.constant 0 : index
      %66 = vector.load %arg9[%c0_38, %c0_39] : memref<8x1xf32, #tpu.memory_space<vmem>>, vector<8x1xf32>
      tpu.vector_store %arg9[%c0_38, %c0_39], %65 {strides = array<i32>} : memref<8x1xf32, #tpu.memory_space<vmem>>, vector<8x1xf32>,
    } else {
    }
    return
  }
  func.func @transform_0(%arg0: i32, %arg1: i32) -> (i32, i32) {
    %c0_i32 = arith.constant 0 : i32
    %c0_i32_0 = arith.constant 0 : i32
    return %arg0, %c0_i32 : i32, i32
  }
  func.func @transform_1(%arg0: i32, %arg1: i32) -> (i32, i32) {
    %c0_i32 = arith.constant 0 : i32
    %c0_i32_0 = arith.constant 0 : i32
    return %c0_i32, %arg1 : i32, i32
  }
  func.func @transform_2(%arg0: i32, %arg1: i32) -> (i32, i32) {
    %c0_i32 = arith.constant 0 : i32
    %c0_i32_0 = arith.constant 0 : i32
    return %arg0, %c0_i32 : i32, i32
  }
  func.func @transform_3(%arg0: i32, %arg1: i32) -> (i32, i32) {
    %c0_i32 = arith.constant 0 : i32
    %c0_i32_0 = arith.constant 0 : i32
    return %c0_i32, %arg1 : i32, i32
  }
  func.func @transform_4(%arg0: i32, %arg1: i32) -> (i32, i32) {
    %c0_i32 = arith.constant 0 : i32
    %c0_i32_0 = arith.constant 0 : i32
    return %arg0, %c0_i32 : i32, i32
  }
  func.func @transform_5(%arg0: i32, %arg1: i32) -> (i32, i32) {
    %c0_i32 = arith.constant 0 : i32
    return %arg0, %arg1 : i32, i32
  }
  func.func @transform_6(%arg0: i32, %arg1: i32) -> (i32, i32) {
    %c0_i32 = arith.constant 0 : i32
    %c0_i32_0 = arith.constant 0 : i32
    return %arg0, %c0_i32 : i32, i32
  }
  func.func @transform_7(%arg0: i32, %arg1: i32) -> (i32, i32) {
    %c0_i32 = arith.constant 0 : i32
    %c0_i32_0 = arith.constant 0 : i32
    return %arg0, %c0_i32 : i32, i32
  }
}

</mosaic_0001>

<llo_original>
// kernel: tpu_custom_call.1
$region0: #{tpu_custom_call.1}
  #allocation0 [shape = 'u32[]', space=smem, size = 0x4, offset = 0x4, fixed_abs, tag = 'smem constant byte address 0x4 - core index']
  #allocation1 [shape = 'u32[144,128]{1,0:T(1,128)}', space=vmem, size = 0x12000, scoped, tag = 'internal scratch']
  #allocation2 [shape = 'f32[8,1]{1,0:T(8,128)}', space=vmem, size = 0x1000, scoped, tag = 'scratch operand']
  #allocation3 [shape = 'f32[8,1]{1,0:T(8,128)}', space=vmem, size = 0x1000, scoped, tag = 'scratch operand']
  %s0 = inlined_call_operand.vmem [shape: f32[16,32], index: 0, kind: input, shape index: {}]
  %s1 = inlined_call_operand.hbm [shape: f32[32,256], index: 1, kind: input, shape index: {}]
  %s2 = inlined_call_operand.vmem [shape: f32[16,1], index: 2, kind: input, shape index: {}]
  %s3 = inlined_call_operand.vmem [shape: f32[1,256], index: 3, kind: input, shape index: {}]
  %s4 = inlined_call_operand.vmem [shape: s32[16,1], index: 4, kind: input, shape index: {}]
  %s5 = inlined_call_operand.hbm [shape: f32[16,256], index: 5, kind: output, shape index: {0}]
  %s6 = inlined_call_operand.vmem [shape: f32[16,1], index: 6, kind: output, shape index: {1}]
  %s7 = inlined_call_operand.vmem [shape: f32[16,1], index: 7, kind: output, shape index: {2}]
  %8 = xla_tuple %s5, %s6, %s7
  %s9 = sld [smem:[#allocation0]]
  $region81: #{tpu_custom_call.1} parent=0
    _
  %s11 = ssub.s32 1, %s9
  %s12 = scalar_select 0, %s11, %s9
  $region1: #{tpu_custom_call.1} parent=0
    #allocation4 [shape = 'u8[32768]{0}', space=vmem, size = 0x8000, scoped, tag = 'input window, operand 1']
    #allocation5 [shape = 's32[2]{0}', space=sflag, size = 0x8, scoped, tag = 'scoped memory for tpu_custom_call.1']
    #allocation6 [shape = 's32[2]{0}', space=sflag, size = 0x8, scoped, tag = 'scoped memory for tpu_custom_call.1']
    #allocation7 [shape = 'u8[8192]{0}', space=vmem, size = 0x2000, scoped, tag = 'output window, operand 0']
    %13 = vsyncpa [#allocation5], 0
    %s14 = scalar_lea.sflag [#allocation5], 1
    %15 = vsyncpa %s14, 0
    %16 = vsyncpa [#allocation6], 0
    %s17 = scalar_lea.sflag [#allocation6], 1
    %18 = vsyncpa %s17, 0
    loop: start=0, step=1, limit=6
    $region2: #{tpu_custom_call.1} parent=1 // loop_pre_header
      _
    $region3: #{tpu_custom_call.1} parent=1 // loop_header
      %s20 = sphi 0, %s24
      %p21 = scmp.ge.s32.totalorder %s20, 6
      %s27 = sphi 0, %s39
      %s28 = sphi 0, %s35
      %s29 = sphi 0, %s27
      %s30 = sphi 0, %s28
      %s31 = sphi 0, %s29
      %s32 = sphi 0, %s30
      %s42 = sphi 0, %s44
      %s45 = sphi 0, %s42
      %s46 = sphi 0, %s45
      %s62 = sphi 0, %s46
      %s68 = sphi 0, %s70
      %s71 = sphi 0, %s68
      %s72 = sphi 0, %s71
      %s88 = sphi 0, %s72
      %s94 = sphi 0, %s96
      %s97 = sphi 0, %s94
      %s98 = sphi 0, %s97
      %s114 = sphi 0, %s98
      %s120 = sphi 0, %s122
      %s123 = sphi 0, %s120
      %s124 = sphi 0, %s123
      %s140 = sphi 0, %s124
      %s146 = sphi 0, %s148
      %s149 = sphi 0, %s146
      %s150 = sphi 0, %s149
      %s166 = sphi 0, %s150
      %s174 = sphi 0, %s176
      %s177 = sphi 0, %s174
      %s178 = sphi 0, %s177
      %s194 = sphi 0, %s178
      %s200 = sphi 0, %s202
      %s203 = sphi 0, %s200
      %s204 = sphi 0, %s203
      %s220 = sphi 0, %s204
      %s226 = sphi 0, %s228
      %s229 = sphi 0, %s226
      %s230 = sphi 0, %s229
      %s246 = sphi 0, %s230
    $region4: #{tpu_custom_call.1} parent=1 // loop_header_branch
      %23 = sbr.rel (%p21) target = $region8
    $region5: #{tpu_custom_call.1} parent=1 // loop_body
      %s25 = ssub.s32 %s20, 1
      %s26 = ssub.s32 %s20, 2
      %s33 = sadd.s32 1, %s28
      %p34 = scmp.ge.s32.totalorder %s33, 2
      %s35 = scalar_select %p34, 0, %s33
      %s36 = sadd.s32 1, %s27
      %s37 = scalar_select %p34, %s36, %s27
      %p38 = scmp.ge.s32.totalorder %s37, 2
      %s39 = scalar_select %p38, 0, %s37
      %s40 = ssub.s32 %s27, %s39
      %p41 = scmp.eq.s32.totalorder %s40, 0
      %s43 = sadd.s32 %s42, 1
      %s44 = scalar_select %p41, %s42, %s43
      %p47 = pneg %p41
      %p48 = scmp.eq.s32.totalorder %s20, 3
      %p49 = por %p47, %p48
      %p50 = scmp.ne.s32.totalorder %s42, %s45
      %p51 = scmp.eq.s32.totalorder %s20, 0
      %p52 = por %p50, %p51
      %p53 = scmp.ne.s32.totalorder %s42, %s45
      %p54 = scmp.eq.s32.totalorder %s25, 3
      %p55 = por %p53, %p54
      %p56 = scmp.ne.s32.totalorder %s45, %s46
      %p57 = scmp.eq.s32.totalorder %s25, 0
      %p58 = por %p56, %p57
      %p59 = scmp.ne.s32.totalorder %s45, %s46
      %p60 = scmp.eq.s32.totalorder %s26, 3
      %p61 = por %p59, %p60
      %p63 = scmp.ne.s32.totalorder %s46, %s62
      %p64 = scmp.eq.s32.totalorder %s26, 0
      %p65 = por %p63, %p64
      %s66 = ssub.s32 %s28, %s35
      %p67 = scmp.eq.s32.totalorder %s66, 0
      %s69 = sadd.s32 %s68, 1
      %s70 = scalar_select %p67, %s68, %s69
      %p73 = pneg %p67
      %p74 = scmp.eq.s32.totalorder %s20, 3
      %p75 = por %p73, %p74
      %p76 = scmp.ne.s32.totalorder %s68, %s71
      %p77 = scmp.eq.s32.totalorder %s20, 0
      %p78 = por %p76, %p77
      %p79 = scmp.ne.s32.totalorder %s68, %s71
      %p80 = scmp.eq.s32.totalorder %s25, 3
      %p81 = por %p79, %p80
      %p82 = scmp.ne.s32.totalorder %s71, %s72
      %p83 = scmp.eq.s32.totalorder %s25, 0
      %p84 = por %p82, %p83
      %p85 = scmp.ne.s32.totalorder %s71, %s72
      %p86 = scmp.eq.s32.totalorder %s26, 3
      %p87 = por %p85, %p86
      %p89 = scmp.ne.s32.totalorder %s72, %s88
      %p90 = scmp.eq.s32.totalorder %s26, 0
      %p91 = por %p89, %p90
      %s92 = ssub.s32 %s27, %s39
      %p93 = scmp.eq.s32.totalorder %s92, 0
      %s95 = sadd.s32 %s94, 1
      %s96 = scalar_select %p93, %s94, %s95
      %p99 = pneg %p93
      %p100 = scmp.eq.s32.totalorder %s20, 3
      %p101 = por %p99, %p100
      %p102 = scmp.ne.s32.totalorder %s94, %s97
      %p103 = scmp.eq.s32.totalorder %s20, 0
      %p104 = por %p102, %p103
      %p105 = scmp.ne.s32.totalorder %s94, %s97
      %p106 = scmp.eq.s32.totalorder %s25, 3
      %p107 = por %p105, %p106
      %p108 = scmp.ne.s32.totalorder %s97, %s98
      %p109 = scmp.eq.s32.totalorder %s25, 0
      %p110 = por %p108, %p109
      %p111 = scmp.ne.s32.totalorder %s97, %s98
      %p112 = scmp.eq.s32.totalorder %s26, 3
      %p113 = por %p111, %p112
      %p115 = scmp.ne.s32.totalorder %s98, %s114
      %p116 = scmp.eq.s32.totalorder %s26, 0
      %p117 = por %p115, %p116
      %s118 = ssub.s32 %s28, %s35
      %p119 = scmp.eq.s32.totalorder %s118, 0
      %s121 = sadd.s32 %s120, 1
      %s122 = scalar_select %p119, %s120, %s121
      %p125 = pneg %p119
      %p126 = scmp.eq.s32.totalorder %s20, 3
      %p127 = por %p125, %p126
      %p128 = scmp.ne.s32.totalorder %s120, %s123
      %p129 = scmp.eq.s32.totalorder %s20, 0
      %p130 = por %p128, %p129
      %p131 = scmp.ne.s32.totalorder %s120, %s123
      %p132 = scmp.eq.s32.totalorder %s25, 3
      %p133 = por %p131, %p132
      %p134 = scmp.ne.s32.totalorder %s123, %s124
      %p135 = scmp.eq.s32.totalorder %s25, 0
      %p136 = por %p134, %p135
      %p137 = scmp.ne.s32.totalorder %s123, %s124
      %p138 = scmp.eq.s32.totalorder %s26, 3
      %p139 = por %p137, %p138
      %p141 = scmp.ne.s32.totalorder %s124, %s140
      %p142 = scmp.eq.s32.totalorder %s26, 0
      %p143 = por %p141, %p142
      %s144 = ssub.s32 %s27, %s39
      %p145 = scmp.eq.s32.totalorder %s144, 0
      %s147 = sadd.s32 %s146, 1
      %s148 = scalar_select %p145, %s146, %s147
      %p151 = pneg %p145
      %p152 = scmp.eq.s32.totalorder %s20, 3
      %p153 = por %p151, %p152
      %p154 = scmp.ne.s32.totalorder %s146, %s149
      %p155 = scmp.eq.s32.totalorder %s20, 0
      %p156 = por %p154, %p155
      %p157 = scmp.ne.s32.totalorder %s146, %s149
      %p158 = scmp.eq.s32.totalorder %s25, 3
      %p159 = por %p157, %p158
      %p160 = scmp.ne.s32.totalorder %s149, %s150
      %p161 = scmp.eq.s32.totalorder %s25, 0
      %p162 = por %p160, %p161
      %p163 = scmp.ne.s32.totalorder %s149, %s150
      %p164 = scmp.eq.s32.totalorder %s26, 3
      %p165 = por %p163, %p164
      %p167 = scmp.ne.s32.totalorder %s150, %s166
      %p168 = scmp.eq.s32.totalorder %s26, 0
      %p169 = por %p167, %p168
      %s170 = ssub.s32 %s27, %s39
      %s171 = ssub.s32 %s28, %s35
      %s172 = sor.u32 %s170, %s171
      %p173 = scmp.eq.s32.totalorder %s172, 0
      %s175 = sadd.s32 %s174, 1
      %s176 = scalar_select %p173, %s174, %s175
      %p179 = pneg %p173
      %p180 = scmp.eq.s32.totalorder %s20, 3
      %p181 = por %p179, %p180
      %p182 = scmp.ne.s32.totalorder %s174, %s177
      %p183 = scmp.eq.s32.totalorder %s20, 0
      %p184 = por %p182, %p183
      %p185 = scmp.ne.s32.totalorder %s174, %s177
      %p186 = scmp.eq.s32.totalorder %s25, 3
      %p187 = por %p185, %p186
      %p188 = scmp.ne.s32.totalorder %s177, %s178
      %p189 = scmp.eq.s32.totalorder %s25, 0
      %p190 = por %p188, %p189
      %p191 = scmp.ne.s32.totalorder %s177, %s178
      %p192 = scmp.eq.s32.totalorder %s26, 3
      %p193 = por %p191, %p192
      %p195 = scmp.ne.s32.totalorder %s178, %s194
      %p196 = scmp.eq.s32.totalorder %s26, 0
      %p197 = por %p195, %p196
      %s198 = ssub.s32 %s27, %s39
      %p199 = scmp.eq.s32.totalorder %s198, 0
      %s201 = sadd.s32 %s200, 1
      %s202 = scalar_select %p199, %s200, %s201
      %p205 = pneg %p199
      %p206 = scmp.eq.s32.totalorder %s20, 3
      %p207 = por %p205, %p206
      %p208 = scmp.ne.s32.totalorder %s200, %s203
      %p209 = scmp.eq.s32.totalorder %s20, 0
      %p210 = por %p208, %p209
      %p211 = scmp.ne.s32.totalorder %s200, %s203
      %p212 = scmp.eq.s32.totalorder %s25, 3
      %p213 = por %p211, %p212
      %p214 = scmp.ne.s32.totalorder %s203, %s204
      %p215 = scmp.eq.s32.totalorder %s25, 0
      %p216 = por %p214, %p215
      %p217 = scmp.ne.s32.totalorder %s203, %s204
      %p218 = scmp.eq.s32.totalorder %s26, 3
      %p219 = por %p217, %p218
      %p221 = scmp.ne.s32.totalorder %s204, %s220
      %p222 = scmp.eq.s32.totalorder %s26, 0
      %p223 = por %p221, %p222
      %s224 = ssub.s32 %s27, %s39
      %p225 = scmp.eq.s32.totalorder %s224, 0
      %s227 = sadd.s32 %s226, 1
      %s228 = scalar_select %p225, %s226, %s227
      %p231 = pneg %p225
      %p232 = scmp.eq.s32.totalorder %s20, 3
      %p233 = por %p231, %p232
      %p234 = scmp.ne.s32.totalorder %s226, %s229
      %p235 = scmp.eq.s32.totalorder %s20, 0
      %p236 = por %p234, %p235
      %p237 = scmp.ne.s32.totalorder %s226, %s229
      %p238 = scmp.eq.s32.totalorder %s25, 3
      %p239 = por %p237, %p238
      %p240 = scmp.ne.s32.totalorder %s229, %s230
      %p241 = scmp.eq.s32.totalorder %s25, 0
      %p242 = por %p240, %p241
      %p243 = scmp.ne.s32.totalorder %s229, %s230
      %p244 = scmp.eq.s32.totalorder %s26, 3
      %p245 = por %p243, %p244
      %p247 = scmp.ne.s32.totalorder %s230, %s246
      %p248 = scmp.eq.s32.totalorder %s26, 0
      %p249 = por %p247, %p248
      %p250 = scmp.le.s32.totalorder 1, %s20
      %p251 = scmp.lt.s32.totalorder %s20, 5
      %p252 = pnand %p250, %p251
      %p253 = pneg %p252
      // Predicated region
      $region9: #{tpu_custom_call.1} parent=5 // pred_check
        _
      $region10: #{tpu_custom_call.1} parent=5 // pred_check_branch
        %255 = sbr.rel (%p252) target = $region12
      $region11: #{tpu_custom_call.1} parent=5 // pred_region
        %s256 = ssub.s32 %s20, 1
      $region12: #{tpu_custom_call.1} parent=5 // pred_fallthru
        _
      %p257 = scmp.lt.s32.totalorder %s20, 4
      // Predicated region
      $region13: #{tpu_custom_call.1} parent=5 // pred_check
        %p258 = pneg %p257
      $region14: #{tpu_custom_call.1} parent=5 // pred_check_branch
        %260 = sbr.rel (%p258) target = $region16
      $region15: #{tpu_custom_call.1} parent=5 // pred_region
        // Predicated region
        $region17: #{tpu_custom_call.1} parent=15 // pred_check
          %p261 = pneg %p52
        $region18: #{tpu_custom_call.1} parent=15 // pred_check_branch
          %263 = sbr.rel (%p261) target = $region20
        $region19: #{tpu_custom_call.1} parent=15 // pred_region
          %p264 = scmp.lt.s32.totalorder %s27, 1
          %s265 = scalar_select %p264, %s27, 1
          %s266 = smul.addr %s265, 8
          %s267 = scalar_lea.vmem %s0, %s266
        $region20: #{tpu_custom_call.1} parent=15 // pred_fallthru
          _
        // Predicated region
        $region21: #{tpu_custom_call.1} parent=15 // pred_check
          %p268 = pneg %p78
        $region22: #{tpu_custom_call.1} parent=15 // pred_check_branch
          %270 = sbr.rel (%p268) target = $region24
        $region23: #{tpu_custom_call.1} parent=15 // pred_region
          %s271 = sand.u32 %s68, 1
          %s272 = scalar_lea.sflag [#allocation5], %s271
          %s273 = sand.u32 %s68, 1
          %s274 = smul.addr %s273, 32
          %s275 = scalar_lea.vmem [#allocation4], %s274
          %s277 = ssub.s32 512, 512
          %278 = vsyncadd %s272, %s277
          %s279 = smul.addr %s28, 128
          %s280 = scalar_lea.hbm %s1, %s279
          %s281 = sshll.u32 %s275, 4
          %s282 = int_to_ptr.vmem [resolvable:$true] %s281
          %287 = dma.hbm_to_vmem [thread:$0]  %s280, 512, %s282, %s272, 256, 128, 8
        $region24: #{tpu_custom_call.1} parent=15 // pred_fallthru
          _
        // Predicated region
        $region25: #{tpu_custom_call.1} parent=15 // pred_check
          %p288 = pneg %p104
        $region26: #{tpu_custom_call.1} parent=15 // pred_check_branch
          %290 = sbr.rel (%p288) target = $region28
        $region27: #{tpu_custom_call.1} parent=15 // pred_region
          %p291 = scmp.lt.s32.totalorder %s27, 1
          %s292 = scalar_select %p291, %s27, 1
          %s293 = smul.addr %s292, 8
          %s294 = scalar_lea.vmem %s2, %s293
        $region28: #{tpu_custom_call.1} parent=15 // pred_fallthru
          _
        // Predicated region
        $region29: #{tpu_custom_call.1} parent=15 // pred_check
          %p295 = pneg %p130
        $region30: #{tpu_custom_call.1} parent=15 // pred_check_branch
          %297 = sbr.rel (%p295) target = $region32
        $region31: #{tpu_custom_call.1} parent=15 // pred_region
          %p298 = scmp.lt.s32.totalorder %s28, 1
          %s299 = scalar_select %p298, %s28, 1
          %s300 = scalar_lea.vmem %s3, %s299
        $region32: #{tpu_custom_call.1} parent=15 // pred_fallthru
          _
        // Predicated region
        $region33: #{tpu_custom_call.1} parent=15 // pred_check
          %p301 = pneg %p156
        $region34: #{tpu_custom_call.1} parent=15 // pred_check_branch
          %303 = sbr.rel (%p301) target = $region36
        $region35: #{tpu_custom_call.1} parent=15 // pred_region
          %p304 = scmp.lt.s32.totalorder %s27, 1
          %s305 = scalar_select %p304, %s27, 1
          %s306 = smul.addr %s305, 8
          %s307 = scalar_lea.vmem %s4, %s306
        $region36: #{tpu_custom_call.1} parent=15 // pred_fallthru
          _
      $region16: #{tpu_custom_call.1} parent=5 // pred_fallthru
        _
      %p308 = scmp.le.s32.totalorder 1, %s20
      %p309 = scmp.lt.s32.totalorder %s20, 5
      %p310 = pnand %p308, %p309
      %p311 = pneg %p310
      // Predicated region
      $region37: #{tpu_custom_call.1} parent=5 // pred_check
        _
      $region38: #{tpu_custom_call.1} parent=5 // pred_check_branch
        %313 = sbr.rel (%p310) target = $region40
      $region39: #{tpu_custom_call.1} parent=5 // pred_region
        %s314 = ssub.s32 %s20, 1
        %s315 = sand.u32 %s71, 1
        %s316 = scalar_lea.sflag [#allocation5], %s315
        %s317 = sand.u32 %s71, 1
        %s318 = smul.addr %s317, 32
        %s319 = scalar_lea.vmem [#allocation4], %s318
        // Predicated region
        $region41: #{tpu_custom_call.1} parent=39 // pred_check
          %p320 = pneg %p84
        $region42: #{tpu_custom_call.1} parent=39 // pred_check_branch
          %322 = sbr.rel (%p320) target = $region44
        $region43: #{tpu_custom_call.1} parent=39 // pred_region
          %323 = dma.done %s316, 512
        $region44: #{tpu_custom_call.1} parent=39 // pred_fallthru
          _
        %p324 = scmp.lt.s32.totalorder %s29, 1
        %s325 = scalar_select %p324, %s29, 1
        %s326 = smul.addr %s325, 8
        %s327 = scalar_lea.vmem %s0, %s326
        %p328 = pneg %p58
        %p329 = pneg %p55
        %s330 = sand.u32 %s71, 1
        %s331 = scalar_lea.sflag [#allocation5], %s330
        %s332 = sand.u32 %s71, 1
        %s333 = smul.addr %s332, 32
        %s334 = scalar_lea.vmem [#allocation4], %s333
        %p335 = pneg %p84
        %p336 = pneg %p81
        %p337 = scmp.lt.s32.totalorder %s29, 1
        %s338 = scalar_select %p337, %s29, 1
        %s339 = smul.addr %s338, 8
        %s340 = scalar_lea.vmem %s2, %s339
        %p341 = pneg %p110
        %p342 = pneg %p107
        %p343 = scmp.lt.s32.totalorder %s30, 1
        %s344 = scalar_select %p343, %s30, 1
        %s345 = scalar_lea.vmem %s3, %s344
        %p346 = pneg %p136
        %p347 = pneg %p133
        %p348 = scmp.lt.s32.totalorder %s29, 1
        %s349 = scalar_select %p348, %s29, 1
        %s350 = smul.addr %s349, 8
        %s351 = scalar_lea.vmem %s4, %s350
        %p352 = pneg %p162
        %p353 = pneg %p159
        %p354 = pneg %p190
        %p355 = pneg %p187
        %s356 = sand.u32 %s177, 1
        %s357 = scalar_lea.sflag [#allocation6], %s356
        %s358 = sand.u32 %s177, 1
        %s359 = smul.addr %s358, 8
        %s360 = scalar_lea.vmem [#allocation7], %s359
        %p361 = pneg %p216
        %p362 = pneg %p213
        %p363 = scmp.lt.s32.totalorder %s29, 1
        %s364 = scalar_select %p363, %s29, 1
        %s365 = smul.addr %s364, 8
        %s366 = scalar_lea.vmem %s6, %s365
        %p367 = pneg %p242
        %p368 = pneg %p239
        %p369 = scmp.lt.s32.totalorder %s29, 1
        %s370 = scalar_select %p369, %s29, 1
        %s371 = smul.addr %s370, 8
        %s372 = scalar_lea.vmem %s7, %s371
        %p373 = scmp.lt.s32.totalorder %s29, 1
        %s374 = scalar_select %p373, %s29, 1
        %s375 = smul.addr %s374, 8
        %s376 = scalar_lea.vmem %s0, %s375
        %p377 = scmp.lt.s32.totalorder %s29, 1
        %s378 = scalar_select %p377, %s29, 1
        %s379 = smul.addr %s378, 8
        %s380 = scalar_lea.vmem %s2, %s379
        %p381 = scmp.lt.s32.totalorder %s30, 1
        %s382 = scalar_select %p381, %s30, 1
        %s383 = scalar_lea.vmem %s3, %s382
        %p384 = scmp.lt.s32.totalorder %s29, 1
        %s385 = scalar_select %p384, %s29, 1
        %s386 = smul.addr %s385, 8
        %s387 = scalar_lea.vmem %s4, %s386
        %p388 = scmp.lt.s32.totalorder %s29, 1
        %s389 = scalar_select %p388, %s29, 1
        %s390 = smul.addr %s389, 8
        %s391 = scalar_lea.vmem %s6, %s390
        %p392 = scmp.lt.s32.totalorder %s29, 1
        %s393 = scalar_select %p392, %s29, 1
        %s394 = smul.addr %s393, 8
        %s395 = scalar_lea.vmem %s7, %s394
        %p397 = scmp.eq.s32.totalorder %s30, 0
        // Predicated region
        $region45: #{tpu_custom_call.1} parent=39 // pred_check
          %p398 = pneg %p397
        $region46: #{tpu_custom_call.1} parent=39 // pred_check_branch
          %400 = sbr.rel (%p398) target = $region48
        $region47: #{tpu_custom_call.1} parent=39 // pred_region
          %vm401 = vcmask 7168
          %402 = vst.msk [vmem:[#allocation2] sm:$0xff] %vm401, 0.0
          %403 = vst.msk [vmem:[#allocation3] sm:$0xff] %vm401, -inf
        $region48: #{tpu_custom_call.1} parent=39 // pred_fallthru
          _
        %v404 = vld [vmem:[%s376] sm:$0xff]
        %v405 = vld [vmem:[%s380] sm:$0xff]
        %407 = vset.pattern.permute.xlu0 0
        %408 = vperm.xlu0 %407, %v405
        %v409 = vpop.permute.xlu0 %408
        %v411 = vmul.f32 %v404, %v409
        %v412 = vpack.c.bf16 %v411, %v411
        %v413 = vld [vmem:[%s319] sm:$0xff]
        %v414 = vld [vmem:[%s319 + $0x8] sm:$0xff]
        %v415 = vld [vmem:[%s319 + $0x10] sm:$0xff]
        %v416 = vld [vmem:[%s319 + $0x18] sm:$0xff]
        %v417 = vld [vmem:[%s383] sm:$0x1]
        %v419 = vlaneseq
        %v420 = vshrl.u32 %v419, 7
        %v421 = vsub.s32 0, %v420
        %v422 = vrot.slane %v417, %v421
        %v424 = vmul.f32 %v413, %v422
        %v425 = vmul.f32 %v414, %v422
        %v426 = vmul.f32 %v415, %v422
        %v427 = vmul.f32 %v416, %v422
        %v428 = vpack.c.bf16 %v425, %v424
        %v429 = vpack.c.bf16 %v427, %v426
        %vm430 = vcmask 261120
        %v432 = vsel %vm430, %v412, 0
        %434 = vmatprep.subr.bf16.mxu0 0
        %435 = vmatpush1.bf16.msra.mxu0 %v428
        %436 = vmatprep.subr.bf16.mxu0 0
        %437 = vmatpush1.bf16.msra.mxu0 %v429
        %438 = vmatprep.subr.bf16.mxu0 0
        %439 = vmatpush1.bf16.msra.mxu0 0
        %440 = vmatprep.subr.bf16.mxu0 0
        %441 = vmatpush1.bf16.msra.mxu0 0
        %442 = vmatprep.subr.bf16.mxu0 0
        %443 = vmatpush1.bf16.msra.mxu0 0
        %444 = vmatprep.subr.bf16.mxu0 0
        %445 = vmatpush1.bf16.msra.mxu0 0
        %446 = vmatprep.subr.bf16.mxu0 0
        %447 = vmatpush1.bf16.msra.mxu0 0
        %448 = vmatprep.subr.bf16.mxu0 0
        %449 = vmatpush1.bf16.msra.mxu0 0
        %450 = vmatprep.subr.bf16.mxu0 0
        %451 = vmatpush1.bf16.msra.mxu0 0
        %452 = vmatprep.subr.bf16.mxu0 0
        %453 = vmatpush1.bf16.msra.mxu0 0
        %454 = vmatprep.subr.bf16.mxu0 0
        %455 = vmatpush1.bf16.msra.mxu0 0
        %456 = vmatprep.subr.bf16.mxu0 0
        %457 = vmatpush1.bf16.msra.mxu0 0
        %458 = vmatprep.subr.bf16.mxu0 0
        %459 = vmatpush1.bf16.msra.mxu0 0
        %460 = vmatprep.subr.bf16.mxu0 0
        %461 = vmatpush1.bf16.msra.mxu0 0
        %462 = vmatprep.subr.bf16.mxu0 0
        %463 = vmatpush1.bf16.msra.mxu0 0
        %464 = vmatprep.subr.bf16.mxu0 0
        %465 = vmatpush1.bf16.msra.mxu0 0
        %466 = vmatprep.mubr.bf16.mxu0 0
        %467 = vmatmul.mubr.bf16.gmra.mrb[0].mxu0 %v432
        %v468 = vpop.f32.mrb[0].mxu0
        %v469 = vadd.f32 0.0, %v468
        %v470 = vpop.f32.mrb[0].mxu0
        %v471 = vpop.f32.mrb[0].mxu0
        %v472 = vpop.f32.mrb[0].mxu0
        %473 = vdwg.mxu0
        %v474 = vmax.f32 %v469, -1.0
        %v475 = vmin.f32 %v474, 1.0
        %v476 = vld [vmem:[%s387] sm:$0xff]
        %vm477 = vcmp.ne.s32.totalorder %v476, 4294967295
        %v478 = vlaneseq
        %v479 = vand.u32 %v478, 127
        %s480 = smul.u32 %s30, 128
        %v481 = vstv %s480
        %v482 = vadd.s32 %v479, %v481
        %483 = vset.pattern.permute.xlu0 0
        %484 = vperm.xlu0 %483, %v476
        %v485 = vpop.permute.xlu0 %484
        %vm486 = vcmp.eq.s32.totalorder %v482, %v485
        %v487 = vsel %vm477, 1, 0
        %488 = vset.pattern.permute.xlu0 0
        %489 = vperm.xlu0 %488, %v487
        %v490 = vpop.permute.xlu0 %489
        %vm491 = vcmp.eq.s32.totalorder %v490, 1
        %vm492 = vmand %vm486, %vm491
        %v493 = vsel %vm492, %v475, 0.0
        %494 = vadd.xlane.f32.xlu0 %v493
        %v495 = vpop.xlane.xlu0 %494
        %v496 = vld [vmem:[#allocation2] sm:$0xff]
        %v497 = vadd.f32 %v496, %v495
        %vm498 = vcmask 7168
        %499 = vst.msk [vmem:[#allocation2] sm:$0xff] %vm498, %v497
        %v500 = vsel %vm492, -1e-12, %v475
        %501 = vmax.xlane.f32.xlu0 %v500
        %v502 = vpop.xlane.xlu0 %501
        %v503 = vld [vmem:[#allocation3] sm:$0xff]
        %v504 = vmax.f32 %v503, %v502
        %505 = vst.msk [vmem:[#allocation3] sm:$0xff] %vm498, %v504
        %v506 = vmul.f32 %v495, %v495
        %v507 = vsub.f32 1.0, %v506
        %v508 = vmax.f32 %v507, 0.0
        %v509 = vrsqrt.pop %v508
        %v510 = vmul.f32 %v508, %v509
        %vm511 = vcmp.eq.f32.partialorder %v508, inf
        %v512 = vsel %vm511, %v508, %v510
        %vm513 = vcmp.eq.f32.partialorder %v508, 0.0
        %v514 = vand.u32 %v508, 2147483648
        %v515 = vsel %vm513, %v514, %v512
        %v516 = vmul.f32 %v495, 0.87758255
        %v517 = vmul.f32 %v515, 0.47942555
        %v518 = vsub.f32 %v516, %v517
        %v519 = vsel %vm492, %v518, %v475
        %v520 = vmul.f32 %v519, 64.0
        %521 = vst [vmem:[%s360] sm:$0xff] %v520
        %p522 = scmp.eq.s32.totalorder %s30, 1
        // Predicated region
        $region49: #{tpu_custom_call.1} parent=39 // pred_check
          %p523 = pneg %p522
        $region50: #{tpu_custom_call.1} parent=39 // pred_check_branch
          %525 = sbr.rel (%p523) target = $region52
        $region51: #{tpu_custom_call.1} parent=39 // pred_region
          %v526 = vld [vmem:[#allocation2] sm:$0xff]
          %527 = vst.msk [vmem:[%s391] sm:$0xff] %vm498, %v526
          %v528 = vld [vmem:[#allocation3] sm:$0xff]
          %529 = vst.msk [vmem:[%s395] sm:$0xff] %vm498, %v528
        $region52: #{tpu_custom_call.1} parent=39 // pred_fallthru
          _
        %s530 = sand.u32 %s177, 1
        %s531 = scalar_lea.sflag [#allocation6], %s530
        %s532 = sand.u32 %s177, 1
        %s533 = smul.addr %s532, 8
        %s534 = scalar_lea.vmem [#allocation7], %s533
        %p535 = scmp.lt.s32.totalorder %s29, 1
        %s536 = scalar_select %p535, %s29, 1
        %s537 = smul.addr %s536, 8
        %s538 = scalar_lea.vmem %s6, %s537
        %p539 = scmp.lt.s32.totalorder %s29, 1
        %s540 = scalar_select %p539, %s29, 1
        %s541 = smul.addr %s540, 8
        %s542 = scalar_lea.vmem %s7, %s541
        // Predicated region
        $region53: #{tpu_custom_call.1} parent=39 // pred_check
          %p543 = pneg %p187
        $region54: #{tpu_custom_call.1} parent=39 // pred_check_branch
          %545 = sbr.rel (%p543) target = $region56
        $region55: #{tpu_custom_call.1} parent=39 // pred_region
          %s547 = ssub.s32 128, 128
          %548 = vsyncadd %s531, %s547
          %s549 = smul.addr %s29, 2
          %s550 = sadd.s32 %s30, %s549
          %s551 = smul.addr %s550, 128
          %s552 = scalar_lea.hbm %s5, %s551
          %s554 = sshll.u32 %s534, 4
          %s555 = int_to_ptr.vmem [resolvable:$true] %s554
          %557 = dma.vmem_to_hbm [thread:$0]  %s555, 128, %s552, %s531
        $region56: #{tpu_custom_call.1} parent=39 // pred_fallthru
          _
        // Predicated region
        $region57: #{tpu_custom_call.1} parent=39 // pred_check
          %p558 = pneg %p213
        $region58: #{tpu_custom_call.1} parent=39 // pred_check_branch
          %560 = sbr.rel (%p558) target = $region60
        $region59: #{tpu_custom_call.1} parent=39 // pred_region
          _
        $region60: #{tpu_custom_call.1} parent=39 // pred_fallthru
          _
        // Predicated region
        $region61: #{tpu_custom_call.1} parent=39 // pred_check
          %p561 = pneg %p239
        $region62: #{tpu_custom_call.1} parent=39 // pred_check_branch
          %563 = sbr.rel (%p561) target = $region64
        $region63: #{tpu_custom_call.1} parent=39 // pred_region
          _
        $region64: #{tpu_custom_call.1} parent=39 // pred_fallthru
          _
      $region40: #{tpu_custom_call.1} parent=5 // pred_fallthru
        _
      %p564 = scmp.le.s32.totalorder 2, %s20
      // Predicated region
      $region65: #{tpu_custom_call.1} parent=5 // pred_check
        %p565 = pneg %p564
      $region66: #{tpu_custom_call.1} parent=5 // pred_check_branch
        %567 = sbr.rel (%p565) target = $region68
      $region67: #{tpu_custom_call.1} parent=5 // pred_region
        %s568 = ssub.s32 %s20, 2
        // Predicated region
        $region69: #{tpu_custom_call.1} parent=67 // pred_check
          %p569 = pneg %p193
        $region70: #{tpu_custom_call.1} parent=67 // pred_check_branch
          %571 = sbr.rel (%p569) target = $region72
        $region71: #{tpu_custom_call.1} parent=67 // pred_region
          %s572 = sand.u32 %s178, 1
          %s573 = scalar_lea.sflag [#allocation6], %s572
          %s574 = sand.u32 %s178, 1
          %s575 = smul.addr %s574, 8
          %s576 = scalar_lea.vmem [#allocation7], %s575
          %577 = dma.done %s573, 128
        $region72: #{tpu_custom_call.1} parent=67 // pred_fallthru
          _
        // Predicated region
        $region73: #{tpu_custom_call.1} parent=67 // pred_check
          %p578 = pneg %p219
        $region74: #{tpu_custom_call.1} parent=67 // pred_check_branch
          %580 = sbr.rel (%p578) target = $region76
        $region75: #{tpu_custom_call.1} parent=67 // pred_region
          %p581 = scmp.lt.s32.totalorder %s31, 1
          %s582 = scalar_select %p581, %s31, 1
          %s583 = smul.addr %s582, 8
          %s584 = scalar_lea.vmem %s6, %s583
        $region76: #{tpu_custom_call.1} parent=67 // pred_fallthru
          _
        // Predicated region
        $region77: #{tpu_custom_call.1} parent=67 // pred_check
          %p585 = pneg %p245
        $region78: #{tpu_custom_call.1} parent=67 // pred_check_branch
          %587 = sbr.rel (%p585) target = $region80
        $region79: #{tpu_custom_call.1} parent=67 // pred_region
          %p588 = scmp.lt.s32.totalorder %s31, 1
          %s589 = scalar_select %p588, %s31, 1
          %s590 = smul.addr %s589, 8
          %s591 = scalar_lea.vmem %s7, %s590
        $region80: #{tpu_custom_call.1} parent=67 // pred_fallthru
          _
      $region68: #{tpu_custom_call.1} parent=5 // pred_fallthru
        _
    $region6: #{tpu_custom_call.1} parent=1 // loop_footer
      %s24 = sadd.s32 1, %s20
    $region7: #{tpu_custom_call.1} parent=1 // loop_footer_branch
      %19 = sbr.rel target = $region3
    $region8: #{tpu_custom_call.1} parent=1 // loop_exit
      _
    %592 = vsyncpa [#allocation5], 1
    %s593 = scalar_lea.sflag [#allocation5], 1
    %594 = vsyncpa %s593, 1
    %595 = vsyncpa [#allocation6], 1
    %s596 = scalar_lea.sflag [#allocation6], 1
    %597 = vsyncpa %s596, 1

</llo_original>
